<compile_context>
chip_gen: v5e
topology: v5e:2x2
jax: 0.10.0
libtpu: 0.0.40
codegen_flags: <defaults>
</compile_context>

<pallas_src>
import jax
import jax.numpy as jnp
from jax.experimental import pallas as pl
from jax.experimental.pallas import tpu as pltpu


def _stable_sigmoid(v):
    # exp(-|v|) <= 1, so no inf intermediates for large |v|.
    e = jnp.exp(-jnp.abs(v))
    return jnp.where(v >= 0.0, 1.0 / (1.0 + e), e / (1.0 + e))


def ca_kernel(x_ref, w1_ref, b1_ref, w2_ref, b2_ref, sel_ref, selT_ref, out_ref):
    """One batch element per grid step.

    x_ref/out_ref : (H, W*C)  lane-dense (lane index = w*C + c)
    w1_ref        : (C, Cr)   squeeze 1x1 conv
    b1_ref        : (1, Cr)
    w2_ref        : (Cr, C)   excite 1x1 conv
    b2_ref        : (1, C)
    sel_ref       : (W*C, C)  0/1 matrix, sel[w*C+c, c] = 1   (channel gather)
    selT_ref      : (C, W*C)  its transpose                   (gate scatter)
    """
    H, WC = x_ref.shape
    C = w1_ref.shape[0]
    W = WC // C

    x2d = x_ref[...]                                                     # (H, W*C)

    # --- global average pool (per channel) ---------------------------------
    # MXU gathers the C-strided lanes of each channel; then a sublane reduce.
    ch = jnp.dot(x2d, sel_ref[...], preferred_element_type=jnp.float32)  # (H, C)
    mean = jnp.sum(ch, axis=0, keepdims=True) * (1.0 / (H * W))          # (1, C)
    mean_h = jnp.broadcast_to(mean, (H, C))                              # single hoisted broadcast

    # --- squeeze / excite (1x1 convs), M = H aligned rows ------------------
    z = jnp.dot(mean_h, w1_ref[...], preferred_element_type=jnp.float32) + b1_ref[...]
    z = jnp.maximum(z, 0.0)
    z = jnp.dot(z, w2_ref[...], preferred_element_type=jnp.float32) + b2_ref[...]
    gate = _stable_sigmoid(z)                                            # (H, C), identical rows

    # --- channel-wise scale -------------------------------------------------
    # (H, C) @ (C, W*C) replicates the gate across the W positions of each
    # lane-packed row, giving exactly the broadcast pattern of the output.
    y = jnp.dot(gate, selT_ref[...], preferred_element_type=jnp.float32)  # (H, W*C)
    out_ref[...] = (x2d * y).astype(out_ref.dtype)                        # unmasked 128-lane stores


def ca_forward(x_ld, w1, b1, w2, b2):
    """x_ld: (N, H, W*C) lane-dense NHWC view. Returns same layout."""
    N, H, WC = x_ld.shape
    C = w1.shape[0]
    W = WC // C

    # Constant 0/1 selection matrices (built once, outside the kernel).
    sel = jnp.tile(jnp.eye(C, dtype=x_ld.dtype), (W, 1))   # (W*C, C)
    selT = sel.T                                            # (C, W*C)

    return pl.pallas_call(
        ca_kernel,
        out_shape=jax.ShapeDtypeStruct((N, H, WC), x_ld.dtype),
        grid=(N,),
        in_specs=[
            pl.BlockSpec((None, H, WC), lambda n: (n, 0, 0)),   # x, streamed per batch
            pl.BlockSpec(w1.shape, lambda n: (0, 0)),
            pl.BlockSpec(b1.shape, lambda n: (0, 0)),
            pl.BlockSpec(w2.shape, lambda n: (0, 0)),
            pl.BlockSpec(b2.shape, lambda n: (0, 0)),
            pl.BlockSpec(sel.shape, lambda n: (0, 0)),
            pl.BlockSpec(selT.shape, lambda n: (0, 0)),
        ],
        out_specs=pl.BlockSpec((None, H, WC), lambda n: (n, 0, 0)),
        compiler_params=pltpu.CompilerParams(
            dimension_semantics=("parallel",)),                 # shards batch across TCs on v7x
    )(x_ld, w1, b1, w2, b2, sel, selT)


if __name__ == "__main__":
    # Small shapes consistent with the module: channel=8, reduction=4,
    # batch=2, spatial=16x16  ->  W*C = 128 (exactly one vreg of lanes).
    N, C, H, W = 2, 8, 16, 16
    reduction = 4
    Cr = C // reduction

    key = jax.random.PRNGKey(0)
    ks = jax.random.split(key, 5)

    x_nchw = jax.random.normal(ks[0], (N, C, H, W), dtype=jnp.float32)
    w1 = (0.1 * jax.random.normal(ks[1], (C, Cr))).astype(jnp.float32)   # squeeze 1x1 conv
    b1 = (0.1 * jax.random.normal(ks[2], (1, Cr))).astype(jnp.float32)
    w2 = (0.1 * jax.random.normal(ks[3], (Cr, C))).astype(jnp.float32)   # excite 1x1 conv
    b2 = (0.1 * jax.random.normal(ks[4], (1, C))).astype(jnp.float32)

    # Lane-dense NHWC view of the PyTorch-style NCHW input.
    x_ld = jnp.transpose(x_nchw, (0, 2, 3, 1)).reshape(N, H, W * C)

    out_ld = jax.block_until_ready(ca_forward(x_ld, w1, b1, w2, b2))
    out_nchw = jnp.transpose(out_ld.reshape(N, H, W, C), (0, 3, 1, 2))

    # Pure-JAX reference with the original PyTorch CALayer semantics (NCHW).
    y = jnp.mean(x_nchw, axis=(2, 3))                       # adaptive avg pool to 1x1
    y = jnp.maximum(y @ w1 + b1, 0.0)                       # 1x1 conv + ReLU
    y = jax.nn.sigmoid(y @ w2 + b2)                         # 1x1 conv + Sigmoid
    ref = x_nchw * y[:, :, None, None]                      # channel-wise scale

    assert out_nchw.shape == (N, C, H, W)
    err = jnp.max(jnp.abs(out_nchw - ref))
    assert jnp.allclose(out_nchw, ref, atol=1e-4, rtol=1e-4), f"max abs err = {err}"
    print("KERNEL_OK")
</pallas_src>

<mosaic_0001>
module attributes {stable_mosaic.version = 11 : i64} {
  func.func @ca_kernel(%arg0: i32, %arg1: memref<1x16x128xf32, #tpu.memory_space<vmem>>, %arg2: memref<8x2xf32, #tpu.memory_space<vmem>>, %arg3: memref<1x2xf32, #tpu.memory_space<vmem>>, %arg4: memref<2x8xf32, #tpu.memory_space<vmem>>, %arg5: memref<1x8xf32, #tpu.memory_space<vmem>>, %arg6: memref<128x8xf32, #tpu.memory_space<vmem>>, %arg7: memref<8x128xf32, #tpu.memory_space<vmem>>, %arg8: memref<1x16x128xf32, #tpu.memory_space<vmem>>) attributes {dimension_semantics = [#tpu.dimension_semantics<parallel>], iteration_bounds = array<i64: 2>, scalar_prefetch = 0 : i64, scratch_operands = 0 : i64, tpu.core_type = #tpu.core_type<tc>, window_params = [{transform_indices = @transform_0, window_bounds = array<i64: 1, 16, 128>}, {pipeline_mode = #tpu.pipeline_mode<synchronous>, transform_indices = @transform_1, window_bounds = array<i64: 8, 2>}, {pipeline_mode = #tpu.pipeline_mode<synchronous>, transform_indices = @transform_2, window_bounds = array<i64: 1, 2>}, {pipeline_mode = #tpu.pipeline_mode<synchronous>, transform_indices = @transform_3, window_bounds = array<i64: 2, 8>}, {pipeline_mode = #tpu.pipeline_mode<synchronous>, transform_indices = @transform_4, window_bounds = array<i64: 1, 8>}, {pipeline_mode = #tpu.pipeline_mode<synchronous>, transform_indices = @transform_5, window_bounds = array<i64: 128, 8>}, {pipeline_mode = #tpu.pipeline_mode<synchronous>, transform_indices = @transform_6, window_bounds = array<i64: 8, 128>}, {transform_indices = @transform_7, window_bounds = array<i64: 1, 16, 128>}]} {
    %c0 = arith.constant 0 : index
    %c0_0 = arith.constant 0 : index
    %c0_1 = arith.constant 0 : index
    %0 = vector.load %arg1[%c0, %c0_0, %c0_1] : memref<1x16x128xf32, #tpu.memory_space<vmem>>, vector<1x16x128xf32>
    %1 = vector.shape_cast %0 : vector<1x16x128xf32> to vector<16x128xf32>
    %c0_2 = arith.constant 0 : index
    %c0_3 = arith.constant 0 : index
    %2 = vector.load %arg6[%c0_2, %c0_3] : memref<128x8xf32, #tpu.memory_space<vmem>>, vector<128x8xf32>
    %cst = arith.constant dense<0.000000e+00> : vector<16x8xf32>
    %3 = tpu.matmul %1, %2, %cst {dimension_numbers = #tpu.dot_dimension_numbers<[1], [0], [0], [1], [0, 0, 1, 1], [], []>} : vector<16x128xf32>, vector<128x8xf32>, vector<16x8xf32> -> vector<16x8xf32>
    %cst_4 = arith.constant dense<0.000000e+00> : vector<8xf32>
    %4 = vector.multi_reduction <add>, %3, %cst_4 [0] : vector<16x8xf32> to vector<8xf32>
    %5 = vector.shape_cast %4 : vector<8xf32> to vector<1x8xf32>
    %cst_5 = arith.constant 3.906250e-03 : f32
    %6 = vector.broadcast %cst_5 : f32 to vector<1x8xf32>
    %7 = arith.mulf %5, %6 : vector<1x8xf32>
    %8 = vector.shape_cast %7 : vector<1x8xf32> to vector<1x8xf32>
    %9 = vector.broadcast %8 : vector<1x8xf32> to vector<16x8xf32>
    %c0_6 = arith.constant 0 : index
    %c0_7 = arith.constant 0 : index
    %10 = vector.load %arg2[%c0_6, %c0_7] : memref<8x2xf32, #tpu.memory_space<vmem>>, vector<8x2xf32>
    %cst_8 = arith.constant dense<0.000000e+00> : vector<16x2xf32>
    %11 = tpu.matmul %9, %10, %cst_8 {dimension_numbers = #tpu.dot_dimension_numbers<[1], [0], [0], [1], [0, 0, 1, 1], [], []>} : vector<16x8xf32>, vector<8x2xf32>, vector<16x2xf32> -> vector<16x2xf32>
    %c0_9 = arith.constant 0 : index
    %c0_10 = arith.constant 0 : index
    %12 = vector.load %arg3[%c0_9, %c0_10] : memref<1x2xf32, #tpu.memory_space<vmem>>, vector<1x2xf32>
    %13 = vector.broadcast %12 : vector<1x2xf32> to vector<16x2xf32>
    %14 = arith.addf %11, %13 : vector<16x2xf32>
    %cst_11 = arith.constant 0.000000e+00 : f32
    %15 = vector.broadcast %cst_11 : f32 to vector<16x2xf32>
    %16 = arith.maximumf %14, %15 : vector<16x2xf32>
    %c0_12 = arith.constant 0 : index
    %c0_13 = arith.constant 0 : index
    %17 = vector.load %arg4[%c0_12, %c0_13] : memref<2x8xf32, #tpu.memory_space<vmem>>, vector<2x8xf32>
    %cst_14 = arith.constant dense<0.000000e+00> : vector<16x8xf32>
    %18 = tpu.matmul %16, %17, %cst_14 {dimension_numbers = #tpu.dot_dimension_numbers<[1], [0], [0], [1], [0, 0, 1, 1], [], []>} : vector<16x2xf32>, vector<2x8xf32>, vector<16x8xf32> -> vector<16x8xf32>
    %c0_15 = arith.constant 0 : index
    %c0_16 = arith.constant 0 : index
    %19 = vector.load %arg5[%c0_15, %c0_16] : memref<1x8xf32, #tpu.memory_space<vmem>>, vector<1x8xf32>
    %20 = vector.broadcast %19 : vector<1x8xf32> to vector<16x8xf32>
    %21 = arith.addf %18, %20 : vector<16x8xf32>
    %22 = math.absf %21 : vector<16x8xf32>
    %cst_17 = arith.constant 0.000000e+00 : f32
    %23 = vector.broadcast %cst_17 : f32 to vector<16x8xf32>
    %24 = arith.subf %23, %22 : vector<16x8xf32>
    %25 = math.exp %24 : vector<16x8xf32>
    %cst_18 = arith.constant 0.000000e+00 : f32
    %26 = vector.broadcast %cst_18 : f32 to vector<16x8xf32>
    %27 = arith.cmpf oge, %21, %26 : vector<16x8xf32>
    %cst_19 = arith.constant 1.000000e+00 : f32
    %28 = vector.broadcast %cst_19 : f32 to vector<16x8xf32>
    %29 = arith.addf %28, %25 : vector<16x8xf32>
    %cst_20 = arith.constant 1.000000e+00 : f32
    %30 = vector.broadcast %cst_20 : f32 to vector<16x8xf32>
    %31 = arith.divf %30, %29 : vector<16x8xf32>
    %cst_21 = arith.constant 1.000000e+00 : f32
    %32 = vector.broadcast %cst_21 : f32 to vector<16x8xf32>
    %33 = arith.addf %32, %25 : vector<16x8xf32>
    %34 = arith.divf %25, %33 : vector<16x8xf32>
    %35 = arith.select %27, %31, %34 : vector<16x8xi1>, vector<16x8xf32>
    %c0_22 = arith.constant 0 : index
    %c0_23 = arith.constant 0 : index
    %36 = vector.load %arg7[%c0_22, %c0_23] : memref<8x128xf32, #tpu.memory_space<vmem>>, vector<8x128xf32>
    %cst_24 = arith.constant dense<0.000000e+00> : vector<16x128xf32>
    %37 = tpu.matmul %35, %36, %cst_24 {dimension_numbers = #tpu.dot_dimension_numbers<[1], [0], [0], [1], [0, 0, 1, 1], [], []>} : vector<16x8xf32>, vector<8x128xf32>, vector<16x128xf32> -> vector<16x128xf32>
    %38 = arith.mulf %1, %37 : vector<16x128xf32>
    %c0_25 = arith.constant 0 : index
    %c0_26 = arith.constant 0 : index
    %c0_27 = arith.constant 0 : index
    %39 = vector.load %arg8[%c0_25, %c0_26, %c0_27] : memref<1x16x128xf32, #tpu.memory_space<vmem>>, vector<1x16x128xf32>
    %40 = vector.shape_cast %39 : vector<1x16x128xf32> to vector<16x128xf32>
    %41 = vector.shape_cast %38 : vector<16x128xf32> to vector<1x16x128xf32>
    tpu.vector_store %arg8[%c0_25, %c0_26, %c0_27], %41 {strides = array<i32>} : memref<1x16x128xf32, #tpu.memory_space<vmem>>, vector<1x16x128xf32>,
    return
  }
  func.func @transform_0(%arg0: i32) -> (i32, i32, i32) {
    %c0_i32 = arith.constant 0 : i32
    %c0_i32_0 = arith.constant 0 : i32
    %c0_i32_1 = arith.constant 0 : i32
    return %arg0, %c0_i32, %c0_i32_0 : i32, i32, i32
  }
  func.func @transform_1(%arg0: i32) -> (i32, i32) {
    %c0_i32 = arith.constant 0 : i32
    %c0_i32_0 = arith.constant 0 : i32
    %c0_i32_1 = arith.constant 0 : i32
    return %c0_i32, %c0_i32_0 : i32, i32
  }
  func.func @transform_2(%arg0: i32) -> (i32, i32) {
    %c0_i32 = arith.constant 0 : i32
    %c0_i32_0 = arith.constant 0 : i32
    %c0_i32_1 = arith.constant 0 : i32
    return %c0_i32, %c0_i32_0 : i32, i32
  }
  func.func @transform_3(%arg0: i32) -> (i32, i32) {
    %c0_i32 = arith.constant 0 : i32
    %c0_i32_0 = arith.constant 0 : i32
    %c0_i32_1 = arith.constant 0 : i32
    return %c0_i32, %c0_i32_0 : i32, i32
  }
  func.func @transform_4(%arg0: i32) -> (i32, i32) {
    %c0_i32 = arith.constant 0 : i32
    %c0_i32_0 = arith.constant 0 : i32
    %c0_i32_1 = arith.constant 0 : i32
    return %c0_i32, %c0_i32_0 : i32, i32
  }
  func.func @transform_5(%arg0: i32) -> (i32, i32) {
    %c0_i32 = arith.constant 0 : i32
    %c0_i32_0 = arith.constant 0 : i32
    %c0_i32_1 = arith.constant 0 : i32
    return %c0_i32, %c0_i32_0 : i32, i32
  }
  func.func @transform_6(%arg0: i32) -> (i32, i32) {
    %c0_i32 = arith.constant 0 : i32
    %c0_i32_0 = arith.constant 0 : i32
    %c0_i32_1 = arith.constant 0 : i32
    return %c0_i32, %c0_i32_0 : i32, i32
  }
  func.func @transform_7(%arg0: i32) -> (i32, i32, i32) {
    %c0_i32 = arith.constant 0 : i32
    %c0_i32_0 = arith.constant 0 : i32
    %c0_i32_1 = arith.constant 0 : i32
    return %arg0, %c0_i32, %c0_i32_0 : i32, i32, i32
  }
}

</mosaic_0001>

<llo_original>
// kernel: tpu_custom_call.1
$region0: #{tpu_custom_call.1}
  #allocation0 [shape = 'u32[]', space=smem, size = 0x4, offset = 0x4, fixed_abs, tag = 'smem constant byte address 0x4 - core index']
  #allocation1 [shape = 'u32[72,128]{1,0:T(1,128)}', space=vmem, size = 0x9000, scoped, tag = 'internal scratch']
  %s0 = inlined_call_operand.vmem [shape: f32[2,16,128], index: 0, kind: input, shape index: {}]
  %s1 = inlined_call_operand.vmem [shape: f32[8,2], index: 1, kind: input, shape index: {}]
  %s2 = inlined_call_operand.vmem [shape: f32[1,2], index: 2, kind: input, shape index: {}]
  %s3 = inlined_call_operand.vmem [shape: f32[2,8], index: 3, kind: input, shape index: {}]
  %s4 = inlined_call_operand.vmem [shape: f32[1,8], index: 4, kind: input, shape index: {}]
  %s5 = inlined_call_operand.vmem [shape: f32[128,8], index: 5, kind: input, shape index: {}]
  %s6 = inlined_call_operand.vmem [shape: f32[8,128], index: 6, kind: input, shape index: {}]
  %s7 = inlined_call_operand.hbm [shape: f32[2,16,128], index: 7, kind: output, shape index: {}]
  %s8 = sld [smem:[#allocation0]]
  $region61: #{tpu_custom_call.1} parent=0
    _
  %s10 = ssub.s32 1, %s8
  %s11 = scalar_select 0, %s10, %s8
  $region1: #{tpu_custom_call.1} parent=0
    #allocation2 [shape = 'u8[16384]{0}', space=vmem, size = 0x4000, scoped, tag = 'output window, operand 0']
    #allocation3 [shape = 's32[2]{0}', space=sflag, size = 0x8, scoped, tag = 'scoped memory for tpu_custom_call.1']
    %12 = vsyncpa [#allocation3], 0
    %s13 = scalar_lea.sflag [#allocation3], 1
    %14 = vsyncpa %s13, 0
    loop: start=0, step=1, limit=4
    $region2: #{tpu_custom_call.1} parent=1 // loop_pre_header
      _
    $region3: #{tpu_custom_call.1} parent=1 // loop_header
      %s16 = sphi 0, %s20
      %p17 = scmp.ge.s32.totalorder %s16, 4
      %s26 = sphi 0, %s28
      %s29 = sphi 0, %s26
      %s30 = sphi 0, %s29
      %s46 = sphi 0, %s30
      %s50 = sphi 0, %s50
      %s52 = sphi 0, %s50
      %s53 = sphi 0, %s52
      %s67 = sphi 0, %s53
      %s71 = sphi 0, %s71
      %s73 = sphi 0, %s71
      %s74 = sphi 0, %s73
      %s88 = sphi 0, %s74
      %s92 = sphi 0, %s92
      %s94 = sphi 0, %s92
      %s95 = sphi 0, %s94
      %s109 = sphi 0, %s95
      %s113 = sphi 0, %s113
      %s115 = sphi 0, %s113
      %s116 = sphi 0, %s115
      %s130 = sphi 0, %s116
      %s134 = sphi 0, %s134
      %s136 = sphi 0, %s134
      %s137 = sphi 0, %s136
      %s151 = sphi 0, %s137
      %s155 = sphi 0, %s155
      %s157 = sphi 0, %s155
      %s158 = sphi 0, %s157
      %s172 = sphi 0, %s158
      %s178 = sphi 0, %s180
      %s181 = sphi 0, %s178
      %s182 = sphi 0, %s181
      %s198 = sphi 0, %s182
    $region4: #{tpu_custom_call.1} parent=1 // loop_header_branch
      %19 = sbr.rel (%p17) target = $region8
    $region5: #{tpu_custom_call.1} parent=1 // loop_body
      %s21 = ssub.s32 %s16, 1
      %s22 = ssub.s32 %s16, 2
      %s23 = sadd.s32 %s16, 1
      %s24 = ssub.s32 %s16, %s23
      %p25 = scmp.eq.s32.totalorder %s24, 0
      %s27 = sadd.s32 %s26, 1
      %s28 = scalar_select %p25, %s26, %s27
      %p31 = pneg %p25
      %p32 = scmp.eq.s32.totalorder %s16, 1
      %p33 = por %p31, %p32
      %p34 = scmp.ne.s32.totalorder %s26, %s29
      %p35 = scmp.eq.s32.totalorder %s16, 0
      %p36 = por %p34, %p35
      %p37 = scmp.ne.s32.totalorder %s26, %s29
      %p38 = scmp.eq.s32.totalorder %s21, 1
      %p39 = por %p37, %p38
      %p40 = scmp.ne.s32.totalorder %s29, %s30
      %p41 = scmp.eq.s32.totalorder %s21, 0
      %p42 = por %p40, %p41
      %p43 = scmp.ne.s32.totalorder %s29, %s30
      %p44 = scmp.eq.s32.totalorder %s22, 1
      %p45 = por %p43, %p44
      %p47 = scmp.ne.s32.totalorder %s30, %s46
      %p48 = scmp.eq.s32.totalorder %s22, 0
      %p49 = por %p47, %p48
      %s51 = sadd.s32 %s50, 1
      %p54 = scmp.eq.s32.totalorder %s16, 1
      %p55 = scmp.ne.s32.totalorder %s50, %s52
      %p56 = scmp.eq.s32.totalorder %s16, 0
      %p57 = por %p55, %p56
      %p58 = scmp.ne.s32.totalorder %s50, %s52
      %p59 = scmp.eq.s32.totalorder %s21, 1
      %p60 = por %p58, %p59
      %p61 = scmp.ne.s32.totalorder %s52, %s53
      %p62 = scmp.eq.s32.totalorder %s21, 0
      %p63 = por %p61, %p62
      %p64 = scmp.ne.s32.totalorder %s52, %s53
      %p65 = scmp.eq.s32.totalorder %s22, 1
      %p66 = por %p64, %p65
      %p68 = scmp.ne.s32.totalorder %s53, %s67
      %p69 = scmp.eq.s32.totalorder %s22, 0
      %p70 = por %p68, %p69
      %s72 = sadd.s32 %s71, 1
      %p75 = scmp.eq.s32.totalorder %s16, 1
      %p76 = scmp.ne.s32.totalorder %s71, %s73
      %p77 = scmp.eq.s32.totalorder %s16, 0
      %p78 = por %p76, %p77
      %p79 = scmp.ne.s32.totalorder %s71, %s73
      %p80 = scmp.eq.s32.totalorder %s21, 1
      %p81 = por %p79, %p80
      %p82 = scmp.ne.s32.totalorder %s73, %s74
      %p83 = scmp.eq.s32.totalorder %s21, 0
      %p84 = por %p82, %p83
      %p85 = scmp.ne.s32.totalorder %s73, %s74
      %p86 = scmp.eq.s32.totalorder %s22, 1
      %p87 = por %p85, %p86
      %p89 = scmp.ne.s32.totalorder %s74, %s88
      %p90 = scmp.eq.s32.totalorder %s22, 0
      %p91 = por %p89, %p90
      %s93 = sadd.s32 %s92, 1
      %p96 = scmp.eq.s32.totalorder %s16, 1
      %p97 = scmp.ne.s32.totalorder %s92, %s94
      %p98 = scmp.eq.s32.totalorder %s16, 0
      %p99 = por %p97, %p98
      %p100 = scmp.ne.s32.totalorder %s92, %s94
      %p101 = scmp.eq.s32.totalorder %s21, 1
      %p102 = por %p100, %p101
      %p103 = scmp.ne.s32.totalorder %s94, %s95
      %p104 = scmp.eq.s32.totalorder %s21, 0
      %p105 = por %p103, %p104
      %p106 = scmp.ne.s32.totalorder %s94, %s95
      %p107 = scmp.eq.s32.totalorder %s22, 1
      %p108 = por %p106, %p107
      %p110 = scmp.ne.s32.totalorder %s95, %s109
      %p111 = scmp.eq.s32.totalorder %s22, 0
      %p112 = por %p110, %p111
      %s114 = sadd.s32 %s113, 1
      %p117 = scmp.eq.s32.totalorder %s16, 1
      %p118 = scmp.ne.s32.totalorder %s113, %s115
      %p119 = scmp.eq.s32.totalorder %s16, 0
      %p120 = por %p118, %p119
      %p121 = scmp.ne.s32.totalorder %s113, %s115
      %p122 = scmp.eq.s32.totalorder %s21, 1
      %p123 = por %p121, %p122
      %p124 = scmp.ne.s32.totalorder %s115, %s116
      %p125 = scmp.eq.s32.totalorder %s21, 0
      %p126 = por %p124, %p125
      %p127 = scmp.ne.s32.totalorder %s115, %s116
      %p128 = scmp.eq.s32.totalorder %s22, 1
      %p129 = por %p127, %p128
      %p131 = scmp.ne.s32.totalorder %s116, %s130
      %p132 = scmp.eq.s32.totalorder %s22, 0
      %p133 = por %p131, %p132
      %s135 = sadd.s32 %s134, 1
      %p138 = scmp.eq.s32.totalorder %s16, 1
      %p139 = scmp.ne.s32.totalorder %s134, %s136
      %p140 = scmp.eq.s32.totalorder %s16, 0
      %p141 = por %p139, %p140
      %p142 = scmp.ne.s32.totalorder %s134, %s136
      %p143 = scmp.eq.s32.totalorder %s21, 1
      %p144 = por %p142, %p143
      %p145 = scmp.ne.s32.totalorder %s136, %s137
      %p146 = scmp.eq.s32.totalorder %s21, 0
      %p147 = por %p145, %p146
      %p148 = scmp.ne.s32.totalorder %s136, %s137
      %p149 = scmp.eq.s32.totalorder %s22, 1
      %p150 = por %p148, %p149
      %p152 = scmp.ne.s32.totalorder %s137, %s151
      %p153 = scmp.eq.s32.totalorder %s22, 0
      %p154 = por %p152, %p153
      %s156 = sadd.s32 %s155, 1
      %p159 = scmp.eq.s32.totalorder %s16, 1
      %p160 = scmp.ne.s32.totalorder %s155, %s157
      %p161 = scmp.eq.s32.totalorder %s16, 0
      %p162 = por %p160, %p161
      %p163 = scmp.ne.s32.totalorder %s155, %s157
      %p164 = scmp.eq.s32.totalorder %s21, 1
      %p165 = por %p163, %p164
      %p166 = scmp.ne.s32.totalorder %s157, %s158
      %p167 = scmp.eq.s32.totalorder %s21, 0
      %p168 = por %p166, %p167
      %p169 = scmp.ne.s32.totalorder %s157, %s158
      %p170 = scmp.eq.s32.totalorder %s22, 1
      %p171 = por %p169, %p170
      %p173 = scmp.ne.s32.totalorder %s158, %s172
      %p174 = scmp.eq.s32.totalorder %s22, 0
      %p175 = por %p173, %p174
      %s176 = ssub.s32 %s16, %s23
      %p177 = scmp.eq.s32.totalorder %s176, 0
      %s179 = sadd.s32 %s178, 1
      %s180 = scalar_select %p177, %s178, %s179
      %p183 = pneg %p177
      %p184 = scmp.eq.s32.totalorder %s16, 1
      %p185 = por %p183, %p184
      %p186 = scmp.ne.s32.totalorder %s178, %s181
      %p187 = scmp.eq.s32.totalorder %s16, 0
      %p188 = por %p186, %p187
      %p189 = scmp.ne.s32.totalorder %s178, %s181
      %p190 = scmp.eq.s32.totalorder %s21, 1
      %p191 = por %p189, %p190
      %p192 = scmp.ne.s32.totalorder %s181, %s182
      %p193 = scmp.eq.s32.totalorder %s21, 0
      %p194 = por %p192, %p193
      %p195 = scmp.ne.s32.totalorder %s181, %s182
      %p196 = scmp.eq.s32.totalorder %s22, 1
      %p197 = por %p195, %p196
      %p199 = scmp.ne.s32.totalorder %s182, %s198
      %p200 = scmp.eq.s32.totalorder %s22, 0
      %p201 = por %p199, %p200
      %p202 = scmp.le.s32.totalorder 1, %s16
      %p203 = scmp.lt.s32.totalorder %s16, 3
      %p204 = pnand %p202, %p203
      %p205 = pneg %p204
      // Predicated region
      $region9: #{tpu_custom_call.1} parent=5 // pred_check
        _
      $region10: #{tpu_custom_call.1} parent=5 // pred_check_branch
        %207 = sbr.rel (%p204) target = $region12
      $region11: #{tpu_custom_call.1} parent=5 // pred_region
        %s208 = ssub.s32 %s16, 1
        // Predicated region
        $region13: #{tpu_custom_call.1} parent=11 // pred_check
          %p209 = pneg %p63
        $region14: #{tpu_custom_call.1} parent=11 // pred_check_branch
          %211 = sbr.rel (%p209) target = $region16
        $region15: #{tpu_custom_call.1} parent=11 // pred_region
          _
        $region16: #{tpu_custom_call.1} parent=11 // pred_fallthru
          _
        // Predicated region
        $region17: #{tpu_custom_call.1} parent=11 // pred_check
          %p212 = pneg %p84
        $region18: #{tpu_custom_call.1} parent=11 // pred_check_branch
          %214 = sbr.rel (%p212) target = $region20
        $region19: #{tpu_custom_call.1} parent=11 // pred_region
          _
        $region20: #{tpu_custom_call.1} parent=11 // pred_fallthru
          _
        // Predicated region
        $region21: #{tpu_custom_call.1} parent=11 // pred_check
          %p215 = pneg %p105
        $region22: #{tpu_custom_call.1} parent=11 // pred_check_branch
          %217 = sbr.rel (%p215) target = $region24
        $region23: #{tpu_custom_call.1} parent=11 // pred_region
          _
        $region24: #{tpu_custom_call.1} parent=11 // pred_fallthru
          _
        // Predicated region
        $region25: #{tpu_custom_call.1} parent=11 // pred_check
          %p218 = pneg %p126
        $region26: #{tpu_custom_call.1} parent=11 // pred_check_branch
          %220 = sbr.rel (%p218) target = $region28
        $region27: #{tpu_custom_call.1} parent=11 // pred_region
          _
        $region28: #{tpu_custom_call.1} parent=11 // pred_fallthru
          _
        // Predicated region
        $region29: #{tpu_custom_call.1} parent=11 // pred_check
          %p221 = pneg %p147
        $region30: #{tpu_custom_call.1} parent=11 // pred_check_branch
          %223 = sbr.rel (%p221) target = $region32
        $region31: #{tpu_custom_call.1} parent=11 // pred_region
          _
        $region32: #{tpu_custom_call.1} parent=11 // pred_fallthru
          _
        // Predicated region
        $region33: #{tpu_custom_call.1} parent=11 // pred_check
          %p224 = pneg %p168
        $region34: #{tpu_custom_call.1} parent=11 // pred_check_branch
          %226 = sbr.rel (%p224) target = $region36
        $region35: #{tpu_custom_call.1} parent=11 // pred_region
          _
        $region36: #{tpu_custom_call.1} parent=11 // pred_fallthru
          _
      $region12: #{tpu_custom_call.1} parent=5 // pred_fallthru
        _
      %p227 = scmp.lt.s32.totalorder %s16, 2
      // Predicated region
      $region37: #{tpu_custom_call.1} parent=5 // pred_check
        %p228 = pneg %p227
      $region38: #{tpu_custom_call.1} parent=5 // pred_check_branch
        %230 = sbr.rel (%p228) target = $region40
      $region39: #{tpu_custom_call.1} parent=5 // pred_region
        // Predicated region
        $region41: #{tpu_custom_call.1} parent=39 // pred_check
          %p231 = pneg %p36
        $region42: #{tpu_custom_call.1} parent=39 // pred_check_branch
          %233 = sbr.rel (%p231) target = $region44
        $region43: #{tpu_custom_call.1} parent=39 // pred_region
          %p234 = scmp.lt.s32.totalorder %s16, 1
          %s235 = scalar_select %p234, %s16, 1
          %s236 = smul.addr %s235, 2
          %s237 = smul.addr %s236, 8
          %s238 = scalar_lea.vmem %s0, %s237
        $region44: #{tpu_custom_call.1} parent=39 // pred_fallthru
          _
      $region40: #{tpu_custom_call.1} parent=5 // pred_fallthru
        _
      %p239 = scmp.le.s32.totalorder 1, %s16
      %p240 = scmp.lt.s32.totalorder %s16, 3
      %p241 = pnand %p239, %p240
      %p242 = pneg %p241
      // Predicated region
      $region45: #{tpu_custom_call.1} parent=5 // pred_check
        _
      $region46: #{tpu_custom_call.1} parent=5 // pred_check_branch
        %244 = sbr.rel (%p241) target = $region48
      $region47: #{tpu_custom_call.1} parent=5 // pred_region
        %s245 = ssub.s32 %s16, 1
        %p246 = scmp.lt.s32.totalorder %s21, 1
        %s247 = scalar_select %p246, %s21, 1
        %s248 = smul.addr %s247, 2
        %s249 = smul.addr %s248, 8
        %s250 = scalar_lea.vmem %s0, %s249
        %p251 = pneg %p42
        %p252 = pneg %p39
        %p253 = pneg %p63
        %p254 = pneg %p60
        %p255 = pneg %p84
        %p256 = pneg %p81
        %p257 = pneg %p105
        %p258 = pneg %p102
        %p259 = pneg %p126
        %p260 = pneg %p123
        %p261 = pneg %p147
        %p262 = pneg %p144
        %p263 = pneg %p168
        %p264 = pneg %p165
        %p265 = pneg %p194
        %p266 = pneg %p191
        %s267 = sand.u32 %s181, 1
        %s268 = scalar_lea.sflag [#allocation3], %s267
        %s269 = sand.u32 %s181, 1
        %s270 = smul.addr %s269, 16
        %s271 = scalar_lea.vmem [#allocation2], %s270
        %p272 = scmp.lt.s32.totalorder %s21, 1
        %s273 = scalar_select %p272, %s21, 1
        %s274 = smul.addr %s273, 2
        %s275 = smul.addr %s274, 8
        %s276 = scalar_lea.vmem %s0, %s275
        %v277 = vld [vmem:[%s276] sm:$0xff]
        %v278 = vld [vmem:[%s276 + $0x8] sm:$0xff]
        %v279 = vld [vmem:[%s5] sm:$0xff]
        %v280 = vld [vmem:[%s5 + $0x8] sm:$0xff]
        %v281 = vld [vmem:[%s5 + $0x10] sm:$0xff]
        %v282 = vld [vmem:[%s5 + $0x18] sm:$0xff]
        %v283 = vld [vmem:[%s5 + $0x20] sm:$0xff]
        %v284 = vld [vmem:[%s5 + $0x28] sm:$0xff]
        %v285 = vld [vmem:[%s5 + $0x30] sm:$0xff]
        %v286 = vld [vmem:[%s5 + $0x38] sm:$0xff]
        %v287 = vld [vmem:[%s5 + $0x40] sm:$0xff]
        %v288 = vld [vmem:[%s5 + $0x48] sm:$0xff]
        %v289 = vld [vmem:[%s5 + $0x50] sm:$0xff]
        %v290 = vld [vmem:[%s5 + $0x58] sm:$0xff]
        %v291 = vld [vmem:[%s5 + $0x60] sm:$0xff]
        %v292 = vld [vmem:[%s5 + $0x68] sm:$0xff]
        %v293 = vld [vmem:[%s5 + $0x70] sm:$0xff]
        %v294 = vld [vmem:[%s5 + $0x78] sm:$0xff]
        %295 = vmatpush.msra.mxu0 %v294
        %296 = vmatpush.msra.mxu0 %v293
        %297 = vmatpush.msra.mxu0 %v292
        %298 = vmatpush.msra.mxu0 %v291
        %299 = vmatpush.msra.mxu0 %v290
        %300 = vmatpush.msra.mxu0 %v289
        %301 = vmatpush.msra.mxu0 %v288
        %302 = vmatpush.msra.mxu0 %v287
        %303 = vmatpush.msra.mxu0 %v286
        %304 = vmatpush.msra.mxu0 %v285
        %305 = vmatpush.msra.mxu0 %v284
        %306 = vmatpush.msra.mxu0 %v283
        %307 = vmatpush.msra.mxu0 %v282
        %308 = vmatpush.msra.mxu0 %v281
        %309 = vmatpush.msra.mxu0 %v280
        %310 = vmatpush.msra.mxu0 %v279
        %311 = vmatmul.f32.gmra.mxu0 %v277
        %v312 = vpop.f32.mrf.mxu0
        %v313 = vadd.f32 0.0, %v312
        %314 = vmatmul.f32.gmra.mxu0 %v278
        %v315 = vpop.f32.mrf.mxu0
        %v316 = vadd.f32 0.0, %v315
        %317 = vdwg.mxu0
        %vm318 = vcmask 64512
        %v319 = vsel %vm318, %v313, 0.0
        %v320 = vsel %vm318, %v316, 0.0
        %v321 = vadd.f32 %v319, %v320
        %v322 = vrot.slane %v321, 4
        %v323 = vadd.f32 %v321, %v322
        %v324 = vrot.slane %v323, 2
        %v325 = vadd.f32 %v323, %v324
        %v326 = vrot.slane %v325, 1
        %v327 = vadd.f32 %v325, %v326
        %v328 = vmul.f32 %v327, 0.00390625
        %v329 = vld [vmem:[%s1] sm:$0xff]
        %v330 = vld [vmem:[%s2] sm:$0x1]
        %v332 = vperm.slane %v330, 0
        %v335 = vsel %vm318, %v328, 0
        %337 = vmatpush.msra.mxu0 0.0
        %338 = vmatpush.msra.mxu0 0.0
        %339 = vmatpush.msra.mxu0 0.0
        %340 = vmatpush.msra.mxu0 0.0
        %341 = vmatpush.msra.mxu0 0.0
        %342 = vmatpush.msra.mxu0 0.0
        %343 = vmatpush.msra.mxu0 0.0
        %344 = vmatpush.msra.mxu0 0.0
        %345 = vmatpush.msra.mxu0 0.0
        %346 = vmatpush.msra.mxu0 0.0
        %347 = vmatpush.msra.mxu0 0.0
        %348 = vmatpush.msra.mxu0 0.0
        %349 = vmatpush.msra.mxu0 0.0
        %350 = vmatpush.msra.mxu0 0.0
        %351 = vmatpush.msra.mxu0 0.0
        %352 = vmatpush.msra.mxu0 %v329
        %353 = vmatmul.f32.gmra.mxu0 %v335
        %v354 = vpop.f32.mrf.mxu0
        %v355 = vadd.f32 %v332, %v354
        %356 = vmatmul.f32.gmra.mxu0 %v335
        %v357 = vpop.f32.mrf.mxu0
        %v358 = vadd.f32 %v332, %v357
        %359 = vdwg.mxu0
        %v360 = vmax.f32 %v355, 0.0
        %v361 = vmax.f32 %v358, 0.0
        %v362 = vld [vmem:[%s3] sm:$0x3]
        %v363 = vld [vmem:[%s4] sm:$0x1]
        %v365 = vperm.slane %v363, 0
        %vm367 = vcmask 15360
        %v369 = vsel %vm367, %v360, 0
        %v372 = vsel %vm367, %v361, 0
        %vm374 = vcmask 1041408
        %v376 = vsel %vm374, %v362, 0
        %378 = vmatpush.msra.mxu0 0.0
        %379 = vmatpush.msra.mxu0 0.0
        %380 = vmatpush.msra.mxu0 0.0
        %381 = vmatpush.msra.mxu0 0.0
        %382 = vmatpush.msra.mxu0 0.0
        %383 = vmatpush.msra.mxu0 0.0
        %384 = vmatpush.msra.mxu0 0.0
        %385 = vmatpush.msra.mxu0 0.0
        %386 = vmatpush.msra.mxu0 0.0
        %387 = vmatpush.msra.mxu0 0.0
        %388 = vmatpush.msra.mxu0 0.0
        %389 = vmatpush.msra.mxu0 0.0
        %390 = vmatpush.msra.mxu0 0.0
        %391 = vmatpush.msra.mxu0 0.0
        %392 = vmatpush.msra.mxu0 0.0
        %393 = vmatpush.msra.mxu0 %v376
        %394 = vmatmul.f32.gmra.mxu0 %v369
        %v395 = vpop.f32.mrf.mxu0
        %v396 = vadd.f32 %v365, %v395
        %397 = vmatmul.f32.gmra.mxu0 %v372
        %v398 = vpop.f32.mrf.mxu0
        %v399 = vadd.f32 %v365, %v398
        %400 = vdwg.mxu0
        %v401 = vand.u32 2147483647, %v396
        %v402 = vand.u32 2147483647, %v399
        %v403 = vsub.f32 0.0, %v401
        %v404 = vsub.f32 0.0, %v402
        %v405 = vmul.f32 %v403, 1.442695
        %v406 = vpow.pop %v405
        %v407 = vmul.f32 %v404, 1.442695
        %v408 = vpow.pop %v407
        %vm409 = vcmp.ge.f32.partialorder %v396, 0.0
        %vm410 = vcmp.ge.f32.partialorder %v399, 0.0
        %v411 = vadd.f32 %v406, 1.0
        %v412 = vadd.f32 %v408, 1.0
        %v413 = vrcp.pop %v411
        %v414 = vmul.f32 %v411, %v413
        %v415 = vsub.f32 1.0, %v414
        %v416 = vmul.f32 %v413, %v415
        %v417 = vadd.f32 %v413, %v416
        %vm418 = vweird.f32 %v411
        %vm419 = vweird.f32 %v413
        %vm420 = vmor %vm418, %vm419
        %v421 = vsel %vm420, %v413, %v417
        %v422 = vand.u32 2147483647, %v411
        %vm423 = vcmp.eq.f32.partialorder %v422, 8.507059e+37
        %v424 = vand.u32 %v411, 2147483648
        %v425 = vor.u32 1.1754944e-38, %v424
        %v426 = vsel %vm423, %v425, %v421
        %v427 = vmul.f32 1.0, %v426
        %v428 = vrcp.pop %v412
        %v429 = vmul.f32 %v412, %v428
        %v430 = vsub.f32 1.0, %v429
        %v431 = vmul.f32 %v428, %v430
        %v432 = vadd.f32 %v428, %v431
        %vm433 = vweird.f32 %v412
        %vm434 = vweird.f32 %v428
        %vm435 = vmor %vm433, %vm434
        %v436 = vsel %vm435, %v428, %v432
        %v437 = vand.u32 2147483647, %v412
        %vm438 = vcmp.eq.f32.partialorder %v437, 8.507059e+37
        %v439 = vand.u32 %v412, 2147483648
        %v440 = vor.u32 1.1754944e-38, %v439
        %v441 = vsel %vm438, %v440, %v436
        %v442 = vmul.f32 1.0, %v441
        %v443 = vmul.f32 %v406, %v426
        %v444 = vmul.f32 %v408, %v441
        %v445 = vsel %vm409, %v427, %v443
        %v446 = vsel %vm410, %v442, %v444
        %v447 = vld [vmem:[%s6] sm:$0xff]
        %v449 = vsel %vm318, %v445, 0
        %v452 = vsel %vm318, %v446, 0
        %454 = vmatpush.msra.mxu0 0.0
        %455 = vmatpush.msra.mxu0 0.0
        %456 = vmatpush.msra.mxu0 0.0
        %457 = vmatpush.msra.mxu0 0.0
        %458 = vmatpush.msra.mxu0 0.0
        %459 = vmatpush.msra.mxu0 0.0
        %460 = vmatpush.msra.mxu0 0.0
        %461 = vmatpush.msra.mxu0 0.0
        %462 = vmatpush.msra.mxu0 0.0
        %463 = vmatpush.msra.mxu0 0.0
        %464 = vmatpush.msra.mxu0 0.0
        %465 = vmatpush.msra.mxu0 0.0
        %466 = vmatpush.msra.mxu0 0.0
        %467 = vmatpush.msra.mxu0 0.0
        %468 = vmatpush.msra.mxu0 0.0
        %469 = vmatpush.msra.mxu0 %v447
        %470 = vmatmul.f32.gmra.mxu0 %v449
        %v471 = vpop.f32.mrf.mxu0
        %v472 = vadd.f32 0.0, %v471
        %473 = vmatmul.f32.gmra.mxu0 %v452
        %v474 = vpop.f32.mrf.mxu0
        %v475 = vadd.f32 0.0, %v474
        %476 = vdwg.mxu0
        %v477 = vmul.f32 %v277, %v472
        %v478 = vmul.f32 %v278, %v475
        %479 = vst [vmem:[%s271] sm:$0xff] %v477
        %480 = vst [vmem:[%s271 + $0x8] sm:$0xff] %v478
        %s481 = sand.u32 %s181, 1
        %s482 = scalar_lea.sflag [#allocation3], %s481
        %s483 = sand.u32 %s181, 1
        %s484 = smul.addr %s483, 16
        %s485 = scalar_lea.vmem [#allocation2], %s484
        // Predicated region
        $region49: #{tpu_custom_call.1} parent=47 // pred_check
          %p486 = pneg %p191
        $region50: #{tpu_custom_call.1} parent=47 // pred_check_branch
          %488 = sbr.rel (%p486) target = $region52
        $region51: #{tpu_custom_call.1} parent=47 // pred_region
          %490 = vsyncadd %s482, 0
          %s491 = smul.addr %s21, 2
          %s492 = smul.addr %s491, 8
          %s493 = scalar_lea.hbm %s7, %s492
          %s494 = sshll.u32 %s485, 4
          %s495 = int_to_ptr.vmem [resolvable:$true] %s494
          %s496 = sshll.u32 %s493, 4
          %s497 = int_to_ptr.hbm [resolvable:$true] %s496
          %502 = dma.vmem_to_hbm [thread:$0]  %s495, 256, %s497, %s482, 128, 128, 8
        $region52: #{tpu_custom_call.1} parent=47 // pred_fallthru
          _
      $region48: #{tpu_custom_call.1} parent=5 // pred_fallthru
        _
      %p503 = scmp.le.s32.totalorder 2, %s16
      // Predicated region
      $region53: #{tpu_custom_call.1} parent=5 // pred_check
        %p504 = pneg %p503
      $region54: #{tpu_custom_call.1} parent=5 // pred_check_branch
        %506 = sbr.rel (%p504) target = $region56
      $region55: #{tpu_custom_call.1} parent=5 // pred_region
        %s507 = ssub.s32 %s16, 2
        // Predicated region
        $region57: #{tpu_custom_call.1} parent=55 // pred_check
          %p508 = pneg %p197
        $region58: #{tpu_custom_call.1} parent=55 // pred_check_branch
          %510 = sbr.rel (%p508) target = $region60
        $region59: #{tpu_custom_call.1} parent=55 // pred_region
          %s511 = sand.u32 %s182, 1
          %s512 = scalar_lea.sflag [#allocation3], %s511
          %s513 = sand.u32 %s182, 1
          %s514 = smul.addr %s513, 16
          %s515 = scalar_lea.vmem [#allocation2], %s514
          %517 = dma.done %s512, 256
        $region60: #{tpu_custom_call.1} parent=55 // pred_fallthru
          _
      $region56: #{tpu_custom_call.1} parent=5 // pred_fallthru
        _
    $region6: #{tpu_custom_call.1} parent=1 // loop_footer
      %s20 = sadd.s32 1, %s16
    $region7: #{tpu_custom_call.1} parent=1 // loop_footer_branch
      %15 = sbr.rel target = $region3
    $region8: #{tpu_custom_call.1} parent=1 // loop_exit
      _
    %518 = vsyncpa [#allocation3], 1
    %s519 = scalar_lea.sflag [#allocation3], 1
    %520 = vsyncpa %s519, 1

</llo_original>
